<compile_context>
chip_gen: v6e
topology: v6e:2x2x1
jax: 0.10.0
libtpu: 0.0.40
codegen_flags: <defaults>
</compile_context>

<pallas_src>
import functools

import jax
import jax.numpy as jnp
from jax import lax
from jax.experimental import pallas as pl
from jax.experimental.pallas import tpu as pltpu


def _lista_classifier_kernel(n_iter, theta_ref, x_ref, w_ref, wb_ref, s_ref,
                             cw_ref, cb_ref, out_ref):
    """Fused LISTA encoder + linear classifier for one batch tile.

    theta_ref: [1]       SMEM  soft-threshold (runtime scalar -> no recompiles)
    x_ref    : [Bt, In]  VMEM  input tile, natural [batch, features] layout
    w_ref    : [C,  In]  VMEM  lista.W.weight (torch [out, in] layout)
    wb_ref   : [C,  1 ]  VMEM  lista.W.bias as an f32 column
    s_ref    : [C,  C ]  VMEM  lista.S.weight (no bias)
    cw_ref   : [Kp, C ]  VMEM  classifier.weight, rows zero-padded to Kp
    cb_ref   : [Kp, 1 ]  VMEM  classifier.bias as an f32 column (zero-padded)
    out_ref  : [Kp, Bt]  VMEM  logits^T tile (lane-dense store, batch on lanes)
    """
    theta = theta_ref[0]
    mxu_dtype = w_ref.dtype            # bf16 fast path / f32 reference path

    # b = W @ x^T + w_b  -> [C, Bt].  Contract the last dims of both operands
    # (q @ k^T pattern) so x stays in its natural [Bt, In] layout and b lands
    # directly in the transposed, lane-dense orientation (batch on lanes).
    contract_last = (((1,), (1,)), ((), ()))
    b = lax.dot_general(w_ref[...], x_ref[...], contract_last,
                        preferred_element_type=jnp.float32) + wb_ref[...]

    def shrink(v):
        # soft-threshold: sign(v)*max(|v|-theta,0) == v - clip(v,-theta,theta)
        return v - jnp.clip(v, -theta, theta)

    S = s_ref[...]                     # hoisted: loaded once, reused per iter
    z = shrink(b)                      # b, z and shrink stay in f32

    def body(_, z):
        zs = jnp.dot(S, z.astype(mxu_dtype), preferred_element_type=jnp.float32)
        return shrink(b + zs)          # f32 accumulation, re-adds f32 b

    z = lax.fori_loop(0, n_iter, body, z, unroll=True)

    logits_t = jnp.dot(cw_ref[...], z.astype(mxu_dtype),
                       preferred_element_type=jnp.float32) + cb_ref[...]
    out_ref[...] = logits_t.astype(out_ref.dtype)


def lista_classifier_forward(x, params, *, theta=0.1, n_iter=3, b_tile=2048,
                             compute_dtype=jnp.bfloat16,
                             transposed_output=False):
    """Forward pass of Classifier: logits = classifier(lista(x)).

    x      : [B, In] (already flattened, as in train()/test()).
    params : dict of torch-layout weights (nn.Linear.weight is [out, in]).
    compute_dtype: dtype of the MXU inputs (x / W / S / classifier.weight).
        bfloat16 gives ~3x fewer MXU passes and half the x HBM read; all
        accumulations, b/z and the shrink comparison stay in f32.
    transposed_output: if True, return lane-dense [n_classes, B] logits so the
        consumer (loss / argmax) can fuse the transpose instead of paying an
        extra HBM round trip for it here.
    """
    B, In = x.shape
    w = params["lista_W_weight"].astype(compute_dtype)            # [C, In]
    wb = params["lista_W_bias"].astype(jnp.float32)[:, None]      # [C, 1]
    s = params["lista_S_weight"].astype(compute_dtype)            # [C, C]
    cw = params["classifier_weight"]                               # [K, C]
    cb = params["classifier_bias"]                                 # [K]
    C = w.shape[0]
    K = cw.shape[0]

    # Pad classifier rows (sublane dim of the output) to a multiple of 8 so the
    # [Kp, Bt] logits store is unmasked; the padding rows are sliced off below.
    K_pad = max(8, ((K + 7) // 8) * 8)
    cw = jnp.pad(cw, ((0, K_pad - K), (0, 0))).astype(compute_dtype)
    cb = jnp.pad(cb, (0, K_pad - K)).astype(jnp.float32)[:, None]

    # Batch tile: multiple of 256 (full MXU N on v6e/v7x, 2x128 lanes on v5e),
    # shrunk for small batches so tiny calls don't do 2048-wide work.
    b_tile = min(b_tile, max(256, -(-B // 256) * 256))
    n_tiles = pl.cdiv(B, b_tile)
    b_pad = n_tiles * b_tile

    # x stays in its natural [B, In] layout (no transpose).  Cast to the MXU
    # input dtype at the HBM boundary; in production, produce/store x in bf16
    # upstream so this cast fuses away.
    xq = x.astype(compute_dtype)
    if b_pad != B:
        # TODO(synk): for production batch sizes that are not a multiple of
        # b_tile, rely on a ragged final block instead of this zero-pad copy.
        xq = jnp.pad(xq, ((0, b_pad - B), (0, 0)))

    theta_arr = jnp.asarray([theta], dtype=jnp.float32)   # SMEM scalar
    kernel = functools.partial(_lista_classifier_kernel, int(n_iter))

    out_t = pl.pallas_call(
        kernel,
        out_shape=jax.ShapeDtypeStruct((K_pad, b_pad), jnp.float32),
        grid_spec=pl.GridSpec(
            grid=(n_tiles,),
            in_specs=[
                pl.BlockSpec(memory_space=pltpu.MemorySpace.SMEM),  # theta
                pl.BlockSpec((b_tile, In), lambda i: (i, 0)),       # x tile
                pl.BlockSpec((C, In), lambda i: (0, 0)),            # W   (resident)
                pl.BlockSpec((C, 1), lambda i: (0, 0)),             # w_b (resident)
                pl.BlockSpec((C, C), lambda i: (0, 0)),             # S   (resident)
                pl.BlockSpec((K_pad, C), lambda i: (0, 0)),         # classifier W
                pl.BlockSpec((K_pad, 1), lambda i: (0, 0)),         # classifier b
            ],
            out_specs=pl.BlockSpec((K_pad, b_tile), lambda i: (0, i)),
        ),
        compiler_params=pltpu.CompilerParams(
            # TODO(synk): on v7x, confirm in the trace that the batch axis is
            # actually split across both TensorCores; if not, switch this axis
            # to pltpu.CORE_PARALLEL.
            dimension_semantics=("parallel",),
            # Raises v5e's 16 MiB default scoped VMEM limit; covers bf16 tiles
            # up to b_tile ~ 8K with double buffering and f32 intermediates.
            vmem_limit_bytes=32 * 1024 * 1024),
    )(theta_arr, xq, w, wb, s, cw, cb)

    if transposed_output:
        return out_t[:K, :B]
    return out_t[:K, :B].T             # torch-layout [B, n_classes] logits


def _reference_forward(x, params, theta=0.1, n_iter=3):
    """Plain-JAX reference (mirrors the PyTorch forward) for sanity checking."""
    b = x @ params["lista_W_weight"].T + params["lista_W_bias"]
    shrink = lambda v: jnp.sign(v) * jnp.maximum(jnp.abs(v) - theta, 0.0)
    z = shrink(b)
    for _ in range(n_iter):
        z = shrink(b + z @ params["lista_S_weight"].T)
    return z @ params["classifier_weight"].T + params["classifier_bias"]


if __name__ == "__main__":
    # Small shapes consistent with the module: flattened input -> code -> classes.
    batch = 2
    input_dim = 64       # e.g. flattened 8x8 image, args.n_channels = 1
    code_dim = 32        # args.code_dim
    n_classes = 10       # args.n_classes
    theta = 0.1
    n_iter = 3

    key = jax.random.PRNGKey(0)
    k = jax.random.split(key, 6)

    params = {
        # torch nn.Linear layout: weight [out, in], bias [out]
        "lista_W_weight": jax.random.normal(k[0], (code_dim, input_dim), jnp.float32) * 0.1,
        "lista_W_bias":   jax.random.normal(k[1], (code_dim,), jnp.float32) * 0.1,
        "lista_S_weight": jax.random.normal(k[2], (code_dim, code_dim), jnp.float32) * 0.1,
        "classifier_weight": jax.random.normal(k[3], (n_classes, code_dim), jnp.float32) * 0.1,
        "classifier_bias":   jax.random.normal(k[4], (n_classes,), jnp.float32) * 0.1,
    }
    x = jax.random.normal(k[5], (batch, input_dim), jnp.float32)

    ref = _reference_forward(x, params, theta=theta, n_iter=n_iter)

    # 1) f32 MXU-input path: tight check of the kernel algorithm itself.
    out_f32 = lista_classifier_forward(x, params, theta=theta, n_iter=n_iter,
                                       compute_dtype=jnp.float32)
    out_f32 = jax.block_until_ready(out_f32)
    assert out_f32.shape == (batch, n_classes)
    assert jnp.allclose(out_f32, ref, atol=5e-3, rtol=5e-3), "f32 mismatch vs reference"

    # 2) bf16 MXU-input fast path (perf-review default): looser tolerance covers
    #    the bf16 rounding of x / W / S / classifier.weight at the MXU inputs.
    out_bf16 = lista_classifier_forward(x, params, theta=theta, n_iter=n_iter,
                                        compute_dtype=jnp.bfloat16)
    out_bf16 = jax.block_until_ready(out_bf16)
    assert out_bf16.shape == (batch, n_classes)
    assert jnp.allclose(out_bf16, ref, atol=5e-2, rtol=5e-2), "bf16 mismatch vs reference"

    print("KERNEL_OK")
</pallas_src>

<mosaic_0001>
module attributes {stable_mosaic.version = 11 : i64} {
  func.func @_lista_classifier_kernel(%arg0: i32, %arg1: memref<1xf32, #tpu.memory_space<smem>>, %arg2: memref<256x64xf32, #tpu.memory_space<vmem>>, %arg3: memref<32x64xf32, #tpu.memory_space<vmem>>, %arg4: memref<32x1xf32, #tpu.memory_space<vmem>>, %arg5: memref<32x32xf32, #tpu.memory_space<vmem>>, %arg6: memref<16x32xf32, #tpu.memory_space<vmem>>, %arg7: memref<16x1xf32, #tpu.memory_space<vmem>>, %arg8: memref<16x256xf32, #tpu.memory_space<vmem>>) attributes {dimension_semantics = [#tpu.dimension_semantics<parallel>], iteration_bounds = array<i64: 1>, scalar_prefetch = 0 : i64, scratch_operands = 0 : i64, tpu.core_type = #tpu.core_type<tc>, window_params = [{transform_indices = @transform_0, window_bounds = array<i64: 1>}, {transform_indices = @transform_1, window_bounds = array<i64: 256, 64>}, {pipeline_mode = #tpu.pipeline_mode<synchronous>, transform_indices = @transform_2, window_bounds = array<i64: 32, 64>}, {pipeline_mode = #tpu.pipeline_mode<synchronous>, transform_indices = @transform_3, window_bounds = array<i64: 32, 1>}, {pipeline_mode = #tpu.pipeline_mode<synchronous>, transform_indices = @transform_4, window_bounds = array<i64: 32, 32>}, {pipeline_mode = #tpu.pipeline_mode<synchronous>, transform_indices = @transform_5, window_bounds = array<i64: 16, 32>}, {pipeline_mode = #tpu.pipeline_mode<synchronous>, transform_indices = @transform_6, window_bounds = array<i64: 16, 1>}, {transform_indices = @transform_7, window_bounds = array<i64: 16, 256>}]} {
    %c0 = arith.constant 0 : index
    %0 = memref.load %arg1[%c0] : memref<1xf32, #tpu.memory_space<smem>>
    %c0_0 = arith.constant 0 : index
    %c0_1 = arith.constant 0 : index
    %1 = vector.load %arg3[%c0_0, %c0_1] : memref<32x64xf32, #tpu.memory_space<vmem>>, vector<32x64xf32>
    %c0_2 = arith.constant 0 : index
    %c0_3 = arith.constant 0 : index
    %2 = vector.load %arg2[%c0_2, %c0_3] : memref<256x64xf32, #tpu.memory_space<vmem>>, vector<256x64xf32>
    %cst = arith.constant dense<0.000000e+00> : vector<32x256xf32>
    %3 = tpu.matmul %1, %2, %cst {dimension_numbers = #tpu.dot_dimension_numbers<[1], [1], [0], [0], [0, 0, 1, 0], [], []>} : vector<32x64xf32>, vector<256x64xf32>, vector<32x256xf32> -> vector<32x256xf32>
    %c0_4 = arith.constant 0 : index
    %c0_5 = arith.constant 0 : index
    %4 = vector.load %arg4[%c0_4, %c0_5] : memref<32x1xf32, #tpu.memory_space<vmem>>, vector<32x1xf32>
    %5 = vector.broadcast %4 : vector<32x1xf32> to vector<32x256xf32>
    %6 = arith.addf %3, %5 : vector<32x256xf32>
    %c0_6 = arith.constant 0 : index
    %c0_7 = arith.constant 0 : index
    %7 = vector.load %arg5[%c0_6, %c0_7] : memref<32x32xf32, #tpu.memory_space<vmem>>, vector<32x32xf32>
    %cst_8 = arith.constant 0.000000e+00 : f32
    %8 = arith.subf %cst_8, %0 : f32
    %9 = vector.broadcast %8 : f32 to vector<32x256xf32>
    %10 = arith.maximumf %9, %6 : vector<32x256xf32>
    %11 = vector.broadcast %0 : f32 to vector<32x256xf32>
    %12 = arith.minimumf %11, %10 : vector<32x256xf32>
    %13 = arith.subf %6, %12 : vector<32x256xf32>
    %c0_i32 = arith.constant 0 : i32
    %cst_9 = arith.constant dense<0.000000e+00> : vector<32x256xf32>
    %14 = tpu.matmul %7, %13, %cst_9 {dimension_numbers = #tpu.dot_dimension_numbers<[1], [0], [0], [1], [0, 0, 1, 1], [], []>} : vector<32x32xf32>, vector<32x256xf32>, vector<32x256xf32> -> vector<32x256xf32>
    %15 = arith.addf %6, %14 : vector<32x256xf32>
    %cst_10 = arith.constant 0.000000e+00 : f32
    %16 = arith.subf %cst_10, %0 : f32
    %17 = vector.broadcast %16 : f32 to vector<32x256xf32>
    %18 = arith.maximumf %17, %15 : vector<32x256xf32>
    %19 = vector.broadcast %0 : f32 to vector<32x256xf32>
    %20 = arith.minimumf %19, %18 : vector<32x256xf32>
    %21 = arith.subf %15, %20 : vector<32x256xf32>
    %c1_i32 = arith.constant 1 : i32
    %cst_11 = arith.constant dense<0.000000e+00> : vector<32x256xf32>
    %22 = tpu.matmul %7, %21, %cst_11 {dimension_numbers = #tpu.dot_dimension_numbers<[1], [0], [0], [1], [0, 0, 1, 1], [], []>} : vector<32x32xf32>, vector<32x256xf32>, vector<32x256xf32> -> vector<32x256xf32>
    %23 = arith.addf %6, %22 : vector<32x256xf32>
    %cst_12 = arith.constant 0.000000e+00 : f32
    %24 = arith.subf %cst_12, %0 : f32
    %25 = vector.broadcast %24 : f32 to vector<32x256xf32>
    %26 = arith.maximumf %25, %23 : vector<32x256xf32>
    %27 = vector.broadcast %0 : f32 to vector<32x256xf32>
    %28 = arith.minimumf %27, %26 : vector<32x256xf32>
    %29 = arith.subf %23, %28 : vector<32x256xf32>
    %c2_i32 = arith.constant 2 : i32
    %cst_13 = arith.constant dense<0.000000e+00> : vector<32x256xf32>
    %30 = tpu.matmul %7, %29, %cst_13 {dimension_numbers = #tpu.dot_dimension_numbers<[1], [0], [0], [1], [0, 0, 1, 1], [], []>} : vector<32x32xf32>, vector<32x256xf32>, vector<32x256xf32> -> vector<32x256xf32>
    %31 = arith.addf %6, %30 : vector<32x256xf32>
    %cst_14 = arith.constant 0.000000e+00 : f32
    %32 = arith.subf %cst_14, %0 : f32
    %33 = vector.broadcast %32 : f32 to vector<32x256xf32>
    %34 = arith.maximumf %33, %31 : vector<32x256xf32>
    %35 = vector.broadcast %0 : f32 to vector<32x256xf32>
    %36 = arith.minimumf %35, %34 : vector<32x256xf32>
    %37 = arith.subf %31, %36 : vector<32x256xf32>
    %c0_15 = arith.constant 0 : index
    %c0_16 = arith.constant 0 : index
    %38 = vector.load %arg6[%c0_15, %c0_16] : memref<16x32xf32, #tpu.memory_space<vmem>>, vector<16x32xf32>
    %cst_17 = arith.constant dense<0.000000e+00> : vector<16x256xf32>
    %39 = tpu.matmul %38, %37, %cst_17 {dimension_numbers = #tpu.dot_dimension_numbers<[1], [0], [0], [1], [0, 0, 1, 1], [], []>} : vector<16x32xf32>, vector<32x256xf32>, vector<16x256xf32> -> vector<16x256xf32>
    %c0_18 = arith.constant 0 : index
    %c0_19 = arith.constant 0 : index
    %40 = vector.load %arg7[%c0_18, %c0_19] : memref<16x1xf32, #tpu.memory_space<vmem>>, vector<16x1xf32>
    %41 = vector.broadcast %40 : vector<16x1xf32> to vector<16x256xf32>
    %42 = arith.addf %39, %41 : vector<16x256xf32>
    %c0_20 = arith.constant 0 : index
    %c0_21 = arith.constant 0 : index
    %43 = vector.load %arg8[%c0_20, %c0_21] : memref<16x256xf32, #tpu.memory_space<vmem>>, vector<16x256xf32>
    tpu.vector_store %arg8[%c0_20, %c0_21], %42 {strides = array<i32>} : memref<16x256xf32, #tpu.memory_space<vmem>>, vector<16x256xf32>,
    return
  }
  func.func @transform_0(%arg0: i32) -> i32 {
    %c0_i32 = arith.constant 0 : i32
    %c0_i32_0 = arith.constant 0 : i32
    return %c0_i32 : i32
  }
  func.func @transform_1(%arg0: i32) -> (i32, i32) {
    %c0_i32 = arith.constant 0 : i32
    %c0_i32_0 = arith.constant 0 : i32
    return %arg0, %c0_i32 : i32, i32
  }
  func.func @transform_2(%arg0: i32) -> (i32, i32) {
    %c0_i32 = arith.constant 0 : i32
    %c0_i32_0 = arith.constant 0 : i32
    %c0_i32_1 = arith.constant 0 : i32
    return %c0_i32, %c0_i32_0 : i32, i32
  }
  func.func @transform_3(%arg0: i32) -> (i32, i32) {
    %c0_i32 = arith.constant 0 : i32
    %c0_i32_0 = arith.constant 0 : i32
    %c0_i32_1 = arith.constant 0 : i32
    return %c0_i32, %c0_i32_0 : i32, i32
  }
  func.func @transform_4(%arg0: i32) -> (i32, i32) {
    %c0_i32 = arith.constant 0 : i32
    %c0_i32_0 = arith.constant 0 : i32
    %c0_i32_1 = arith.constant 0 : i32
    return %c0_i32, %c0_i32_0 : i32, i32
  }
  func.func @transform_5(%arg0: i32) -> (i32, i32) {
    %c0_i32 = arith.constant 0 : i32
    %c0_i32_0 = arith.constant 0 : i32
    %c0_i32_1 = arith.constant 0 : i32
    return %c0_i32, %c0_i32_0 : i32, i32
  }
  func.func @transform_6(%arg0: i32) -> (i32, i32) {
    %c0_i32 = arith.constant 0 : i32
    %c0_i32_0 = arith.constant 0 : i32
    %c0_i32_1 = arith.constant 0 : i32
    return %c0_i32, %c0_i32_0 : i32, i32
  }
  func.func @transform_7(%arg0: i32) -> (i32, i32) {
    %c0_i32 = arith.constant 0 : i32
    %c0_i32_0 = arith.constant 0 : i32
    return %c0_i32, %arg0 : i32, i32
  }
}

</mosaic_0001>

<llo_original>
// kernel: tpu_custom_call.1
$region0: #{tpu_custom_call.1}
  #allocation0 [shape = 'u32[]', space=smem, size = 0x4, offset = 0x4, fixed_abs, tag = 'smem constant byte address 0x4 - core index']
  #allocation1 [shape = 'u32[144,128]{1,0:T(1,128)}', space=vmem, size = 0x12000, scoped, tag = 'internal scratch']
  #allocation2 [shape = 'f32[1]{0:T(128)S(6)}', space=smem, size = 0x200, scoped, tag = 'scoped memory for tpu_custom_call.1']
  %s0 = inlined_call_operand.<no memory space> [shape: f32[1], index: 0, kind: input, shape index: {}]
  %s1 = inlined_call_operand.vmem [shape: f32[256,64], index: 1, kind: input, shape index: {}]
  %s2 = inlined_call_operand.vmem [shape: f32[32,64], index: 2, kind: input, shape index: {}]
  %s3 = inlined_call_operand.vmem [shape: f32[32,1], index: 3, kind: input, shape index: {}]
  %s4 = inlined_call_operand.vmem [shape: f32[32,32], index: 4, kind: input, shape index: {}]
  %s5 = inlined_call_operand.vmem [shape: f32[16,32], index: 5, kind: input, shape index: {}]
  %s6 = inlined_call_operand.vmem [shape: f32[16,1], index: 6, kind: input, shape index: {}]
  %s7 = inlined_call_operand.hbm [shape: f32[16,256], index: 7, kind: output, shape index: {}]
  %s8 = sld [smem:[#allocation0]]
  $region38: #{tpu_custom_call.1} parent=0
    _
  %s10 = ssub.s32 1, %s8
  %s11 = scalar_select 0, %s10, %s8
  %12 = sst [smem:[#allocation2]] %s0
  $region1: #{tpu_custom_call.1} parent=0
    #allocation3 [shape = 'u8[16384]{0}', space=vmem, size = 0x4000, scoped, tag = 'output window, operand 0, single buffered']
    #allocation4 [shape = 's32[1]{0}', space=sflag, size = 0x4, scoped, tag = 'scoped memory for tpu_custom_call.1']
    %13 = vsyncpa [#allocation4], 0
    // Predicated region
    $region2: #{tpu_custom_call.1} parent=1 // pred_check
      _
    $region3: #{tpu_custom_call.1} parent=1 // pred_check_branch
      %15 = sbr.rel (0) target = $region5
    $region4: #{tpu_custom_call.1} parent=1 // pred_region
      _
    $region5: #{tpu_custom_call.1} parent=1 // pred_fallthru
      _
    // Predicated region
    $region6: #{tpu_custom_call.1} parent=1 // pred_check
      _
    $region7: #{tpu_custom_call.1} parent=1 // pred_check_branch
      %17 = sbr.rel (0) target = $region9
    $region8: #{tpu_custom_call.1} parent=1 // pred_region
      _
    $region9: #{tpu_custom_call.1} parent=1 // pred_fallthru
      _
    // Predicated region
    $region10: #{tpu_custom_call.1} parent=1 // pred_check
      _
    $region11: #{tpu_custom_call.1} parent=1 // pred_check_branch
      %19 = sbr.rel (0) target = $region13
    $region12: #{tpu_custom_call.1} parent=1 // pred_region
      _
    $region13: #{tpu_custom_call.1} parent=1 // pred_fallthru
      _
    // Predicated region
    $region14: #{tpu_custom_call.1} parent=1 // pred_check
      _
    $region15: #{tpu_custom_call.1} parent=1 // pred_check_branch
      %21 = sbr.rel (0) target = $region17
    $region16: #{tpu_custom_call.1} parent=1 // pred_region
      _
    $region17: #{tpu_custom_call.1} parent=1 // pred_fallthru
      _
    // Predicated region
    $region18: #{tpu_custom_call.1} parent=1 // pred_check
      _
    $region19: #{tpu_custom_call.1} parent=1 // pred_check_branch
      %23 = sbr.rel (0) target = $region21
    $region20: #{tpu_custom_call.1} parent=1 // pred_region
      _
    $region21: #{tpu_custom_call.1} parent=1 // pred_fallthru
      _
    // Predicated region
    $region22: #{tpu_custom_call.1} parent=1 // pred_check
      _
    $region23: #{tpu_custom_call.1} parent=1 // pred_check_branch
      %25 = sbr.rel (0) target = $region25
    $region24: #{tpu_custom_call.1} parent=1 // pred_region
      _
    $region25: #{tpu_custom_call.1} parent=1 // pred_fallthru
      _
    // Predicated region
    $region26: #{tpu_custom_call.1} parent=1 // pred_check
      _
    $region27: #{tpu_custom_call.1} parent=1 // pred_check_branch
      %27 = sbr.rel (0) target = $region29
    $region28: #{tpu_custom_call.1} parent=1 // pred_region
      _
    $region29: #{tpu_custom_call.1} parent=1 // pred_fallthru
      _
    %s28 = sld [smem:[#allocation2]]
    %v29 = vld [vmem:[%s2] sm:$0xff]
    %v30 = vld [vmem:[%s2 + $0x8] sm:$0xff]
    %v31 = vld [vmem:[%s2 + $0x10] sm:$0xff]
    %v32 = vld [vmem:[%s2 + $0x18] sm:$0xff]
    %v33 = vld [vmem:[%s1] sm:$0xff]
    %v34 = vld [vmem:[%s1 + $0x8] sm:$0xff]
    %v35 = vld [vmem:[%s1 + $0x10] sm:$0xff]
    %v36 = vld [vmem:[%s1 + $0x18] sm:$0xff]
    %v37 = vld [vmem:[%s1 + $0x20] sm:$0xff]
    %v38 = vld [vmem:[%s1 + $0x28] sm:$0xff]
    %v39 = vld [vmem:[%s1 + $0x30] sm:$0xff]
    %v40 = vld [vmem:[%s1 + $0x38] sm:$0xff]
    %v41 = vld [vmem:[%s1 + $0x40] sm:$0xff]
    %v42 = vld [vmem:[%s1 + $0x48] sm:$0xff]
    %v43 = vld [vmem:[%s1 + $0x50] sm:$0xff]
    %v44 = vld [vmem:[%s1 + $0x58] sm:$0xff]
    %v45 = vld [vmem:[%s1 + $0x60] sm:$0xff]
    %v46 = vld [vmem:[%s1 + $0x68] sm:$0xff]
    %v47 = vld [vmem:[%s1 + $0x70] sm:$0xff]
    %v48 = vld [vmem:[%s1 + $0x78] sm:$0xff]
    %v49 = vld [vmem:[%s1 + $0x80] sm:$0xff]
    %v50 = vld [vmem:[%s1 + $0x88] sm:$0xff]
    %v51 = vld [vmem:[%s1 + $0x90] sm:$0xff]
    %v52 = vld [vmem:[%s1 + $0x98] sm:$0xff]
    %v53 = vld [vmem:[%s1 + $0xa0] sm:$0xff]
    %v54 = vld [vmem:[%s1 + $0xa8] sm:$0xff]
    %v55 = vld [vmem:[%s1 + $0xb0] sm:$0xff]
    %v56 = vld [vmem:[%s1 + $0xb8] sm:$0xff]
    %v57 = vld [vmem:[%s1 + $0xc0] sm:$0xff]
    %v58 = vld [vmem:[%s1 + $0xc8] sm:$0xff]
    %v59 = vld [vmem:[%s1 + $0xd0] sm:$0xff]
    %v60 = vld [vmem:[%s1 + $0xd8] sm:$0xff]
    %v61 = vld [vmem:[%s1 + $0xe0] sm:$0xff]
    %v62 = vld [vmem:[%s1 + $0xe8] sm:$0xff]
    %v63 = vld [vmem:[%s1 + $0xf0] sm:$0xff]
    %v64 = vld [vmem:[%s1 + $0xf8] sm:$0xff]
    %v65 = vld [vmem:[%s3] sm:$0xff]
    %v66 = vld [vmem:[%s3 + $0x8] sm:$0xff]
    %v67 = vld [vmem:[%s3 + $0x10] sm:$0xff]
    %v68 = vld [vmem:[%s3 + $0x18] sm:$0xff]
    %70 = vset.pattern.permute.xlu0 0
    %71 = vperm.xlu0 %70, %v65
    %v72 = vpop.permute.xlu0 %71
    %75 = vset.pattern.permute.xlu0 0
    %76 = vperm.xlu0 %75, %v66
    %v77 = vpop.permute.xlu0 %76
    %80 = vset.pattern.permute.xlu0 0
    %81 = vperm.xlu0 %80, %v67
    %v82 = vpop.permute.xlu0 %81
    %85 = vset.pattern.permute.xlu0 0
    %86 = vperm.xlu0 %85, %v68
    %v87 = vpop.permute.xlu0 %86
    %vm89 = vcmask 523264
    %v91 = vsel %vm89, %v29, 0
    %v94 = vsel %vm89, %v30, 0
    %v97 = vsel %vm89, %v31, 0
    %v100 = vsel %vm89, %v32, 0
    %v103 = vsel %vm89, %v33, 0
    %v106 = vsel %vm89, %v34, 0
    %v109 = vsel %vm89, %v35, 0
    %v112 = vsel %vm89, %v36, 0
    %v115 = vsel %vm89, %v37, 0
    %v118 = vsel %vm89, %v38, 0
    %v121 = vsel %vm89, %v39, 0
    %v124 = vsel %vm89, %v40, 0
    %v127 = vsel %vm89, %v41, 0
    %v130 = vsel %vm89, %v42, 0
    %v133 = vsel %vm89, %v43, 0
    %v136 = vsel %vm89, %v44, 0
    %v139 = vsel %vm89, %v45, 0
    %v142 = vsel %vm89, %v46, 0
    %v145 = vsel %vm89, %v47, 0
    %v148 = vsel %vm89, %v48, 0
    %v151 = vsel %vm89, %v49, 0
    %v154 = vsel %vm89, %v50, 0
    %v157 = vsel %vm89, %v51, 0
    %v160 = vsel %vm89, %v52, 0
    %v163 = vsel %vm89, %v53, 0
    %v166 = vsel %vm89, %v54, 0
    %v169 = vsel %vm89, %v55, 0
    %v172 = vsel %vm89, %v56, 0
    %v175 = vsel %vm89, %v57, 0
    %v178 = vsel %vm89, %v58, 0
    %v181 = vsel %vm89, %v59, 0
    %v184 = vsel %vm89, %v60, 0
    %v187 = vsel %vm89, %v61, 0
    %v190 = vsel %vm89, %v62, 0
    %v193 = vsel %vm89, %v63, 0
    %v196 = vsel %vm89, %v64, 0
    %198 = vmatprep.subr.mxu0 0.0
    %199 = vmatpush1.xpose.msra.mxu0 %v148
    %200 = vmatprep.subr.mxu0 0.0
    %201 = vmatpush1.xpose.msra.mxu0 %v145
    %202 = vmatprep.subr.mxu0 0.0
    %203 = vmatpush1.xpose.msra.mxu0 %v142
    %204 = vmatprep.subr.mxu0 0.0
    %205 = vmatpush1.xpose.msra.mxu0 %v139
    %206 = vmatprep.subr.mxu0 0.0
    %207 = vmatpush1.xpose.msra.mxu0 %v136
    %208 = vmatprep.subr.mxu0 0.0
    %209 = vmatpush1.xpose.msra.mxu0 %v133
    %210 = vmatprep.subr.mxu0 0.0
    %211 = vmatpush1.xpose.msra.mxu0 %v130
    %212 = vmatprep.subr.mxu0 0.0
    %213 = vmatpush1.xpose.msra.mxu0 %v127
    %214 = vmatprep.subr.mxu0 0.0
    %215 = vmatpush1.xpose.msra.mxu0 %v124
    %216 = vmatprep.subr.mxu0 0.0
    %217 = vmatpush1.xpose.msra.mxu0 %v121
    %218 = vmatprep.subr.mxu0 0.0
    %219 = vmatpush1.xpose.msra.mxu0 %v118
    %220 = vmatprep.subr.mxu0 0.0
    %221 = vmatpush1.xpose.msra.mxu0 %v115
    %222 = vmatprep.subr.mxu0 0.0
    %223 = vmatpush1.xpose.msra.mxu0 %v112
    %224 = vmatprep.subr.mxu0 0.0
    %225 = vmatpush1.xpose.msra.mxu0 %v109
    %226 = vmatprep.subr.mxu0 0.0
    %227 = vmatpush1.xpose.msra.mxu0 %v106
    %228 = vmatprep.subr.mxu0 0.0
    %229 = vmatpush1.xpose.msra.mxu0 %v103
    %230 = vmatprep.subr.mxu0 0.0
    %231 = vmatpush2.xpose.msra.mxu0 %v196
    %232 = vmatprep.subr.mxu0 0.0
    %233 = vmatpush2.xpose.msra.mxu0 %v193
    %234 = vmatprep.subr.mxu0 0.0
    %235 = vmatpush2.xpose.msra.mxu0 %v190
    %236 = vmatprep.subr.mxu0 0.0
    %237 = vmatpush2.xpose.msra.mxu0 %v187
    %238 = vmatprep.subr.mxu0 0.0
    %239 = vmatpush2.xpose.msra.mxu0 %v184
    %240 = vmatprep.subr.mxu0 0.0
    %241 = vmatpush2.xpose.msra.mxu0 %v181
    %242 = vmatprep.subr.mxu0 0.0
    %243 = vmatpush2.xpose.msra.mxu0 %v178
    %244 = vmatprep.subr.mxu0 0.0
    %245 = vmatpush2.xpose.msra.mxu0 %v175
    %246 = vmatprep.subr.mxu0 0.0
    %247 = vmatpush2.xpose.msra.mxu0 %v172
    %248 = vmatprep.subr.mxu0 0.0
    %249 = vmatpush2.xpose.msra.mxu0 %v169
    %250 = vmatprep.subr.mxu0 0.0
    %251 = vmatpush2.xpose.msra.mxu0 %v166
    %252 = vmatprep.subr.mxu0 0.0
    %253 = vmatpush2.xpose.msra.mxu0 %v163
    %254 = vmatprep.subr.mxu0 0.0
    %255 = vmatpush2.xpose.msra.mxu0 %v160
    %256 = vmatprep.subr.mxu0 0.0
    %257 = vmatpush2.xpose.msra.mxu0 %v157
    %258 = vmatprep.subr.mxu0 0.0
    %259 = vmatpush2.xpose.msra.mxu0 %v154
    %260 = vmatprep.subr.mxu0 0.0
    %261 = vmatpush2.xpose.msra.mxu0 %v151
    %262 = vmatprep.mubr.f32.mxu0 0.0
    %263 = vmatmul.mubr.f32.gmra.mxu0 %v91
    %v264 = vpop.f32.mrf.mxu0
    %v265 = vadd.f32 %v72, %v264
    %v266 = vpop.f32.mrf.mxu0
    %v267 = vadd.f32 %v72, %v266
    %268 = vmatprep.mubr.f32.mxu0 0.0
    %269 = vmatmul.mubr.f32.gmra.mxu0 %v94
    %v270 = vpop.f32.mrf.mxu0
    %v271 = vadd.f32 %v77, %v270
    %v272 = vpop.f32.mrf.mxu0
    %v273 = vadd.f32 %v77, %v272
    %274 = vmatprep.mubr.f32.mxu0 0.0
    %275 = vmatmul.mubr.f32.gmra.mxu0 %v97
    %v276 = vpop.f32.mrf.mxu0
    %v277 = vadd.f32 %v82, %v276
    %v278 = vpop.f32.mrf.mxu0
    %v279 = vadd.f32 %v82, %v278
    %280 = vmatprep.mubr.f32.mxu0 0.0
    %281 = vmatmul.mubr.f32.gmra.mxu0 %v100
    %v282 = vpop.f32.mrf.mxu0
    %v283 = vadd.f32 %v87, %v282
    %v284 = vpop.f32.mrf.mxu0
    %v285 = vadd.f32 %v87, %v284
    %286 = vdwg.mxu0
    %v287 = vld [vmem:[%s4] sm:$0xff]
    %v288 = vld [vmem:[%s4 + $0x8] sm:$0xff]
    %v289 = vld [vmem:[%s4 + $0x10] sm:$0xff]
    %v290 = vld [vmem:[%s4 + $0x18] sm:$0xff]
    %s291 = ssub.f32 0.0, %s28
    %v292 = vstv %s291
    %v293 = vmax.f32 %v292, %v265
    %v294 = vmax.f32 %v292, %v267
    %v295 = vmax.f32 %v292, %v271
    %v296 = vmax.f32 %v292, %v273
    %v297 = vmax.f32 %v292, %v277
    %v298 = vmax.f32 %v292, %v279
    %v299 = vmax.f32 %v292, %v283
    %v300 = vmax.f32 %v292, %v285
    %v301 = vstv %s28
    %v302 = vmin.f32 %v301, %v293
    %v303 = vmin.f32 %v301, %v294
    %v304 = vmin.f32 %v301, %v295
    %v305 = vmin.f32 %v301, %v296
    %v306 = vmin.f32 %v301, %v297
    %v307 = vmin.f32 %v301, %v298
    %v308 = vmin.f32 %v301, %v299
    %v309 = vmin.f32 %v301, %v300
    %v310 = vsub.f32 %v265, %v302
    %v311 = vsub.f32 %v267, %v303
    %v312 = vsub.f32 %v271, %v304
    %v313 = vsub.f32 %v273, %v305
    %v314 = vsub.f32 %v277, %v306
    %v315 = vsub.f32 %v279, %v307
    %v316 = vsub.f32 %v283, %v308
    %v317 = vsub.f32 %v285, %v309
    %vm318 = vcmask 261120
    %v320 = vsel %vm318, %v287, 0
    %v323 = vsel %vm318, %v288, 0
    %v326 = vsel %vm318, %v289, 0
    %v329 = vsel %vm318, %v290, 0
    %331 = vmatprep.subr.mxu0 0.0
    %332 = vmatpush1.msra.mxu0 0.0
    %333 = vmatprep.subr.mxu0 0.0
    %334 = vmatpush1.msra.mxu0 0.0
    %335 = vmatprep.subr.mxu0 0.0
    %336 = vmatpush1.msra.mxu0 0.0
    %337 = vmatprep.subr.mxu0 0.0
    %338 = vmatpush1.msra.mxu0 0.0
    %339 = vmatprep.subr.mxu0 0.0
    %340 = vmatpush1.msra.mxu0 0.0
    %341 = vmatprep.subr.mxu0 0.0
    %342 = vmatpush1.msra.mxu0 0.0
    %343 = vmatprep.subr.mxu0 0.0
    %344 = vmatpush1.msra.mxu0 0.0
    %345 = vmatprep.subr.mxu0 0.0
    %346 = vmatpush1.msra.mxu0 0.0
    %347 = vmatprep.subr.mxu0 0.0
    %348 = vmatpush1.msra.mxu0 0.0
    %349 = vmatprep.subr.mxu0 0.0
    %350 = vmatpush1.msra.mxu0 0.0
    %351 = vmatprep.subr.mxu0 0.0
    %352 = vmatpush1.msra.mxu0 0.0
    %353 = vmatprep.subr.mxu0 0.0
    %354 = vmatpush1.msra.mxu0 0.0
    %355 = vmatprep.subr.mxu0 %v317
    %356 = vmatpush1.msra.mxu0 %v316
    %357 = vmatprep.subr.mxu0 %v315
    %358 = vmatpush1.msra.mxu0 %v314
    %359 = vmatprep.subr.mxu0 %v313
    %360 = vmatpush1.msra.mxu0 %v312
    %361 = vmatprep.subr.mxu0 %v311
    %362 = vmatpush1.msra.mxu0 %v310
    %363 = vmatprep.subr.mxu0 0.0
    %364 = vmatpush2.msra.mxu0 0.0
    %365 = vmatprep.subr.mxu0 0.0
    %366 = vmatpush2.msra.mxu0 0.0
    %367 = vmatprep.subr.mxu0 0.0
    %368 = vmatpush2.msra.mxu0 0.0
    %369 = vmatprep.subr.mxu0 0.0
    %370 = vmatpush2.msra.mxu0 0.0
    %371 = vmatprep.subr.mxu0 0.0
    %372 = vmatpush2.msra.mxu0 0.0
    %373 = vmatprep.subr.mxu0 0.0
    %374 = vmatpush2.msra.mxu0 0.0
    %375 = vmatprep.subr.mxu0 0.0
    %376 = vmatpush2.msra.mxu0 0.0
    %377 = vmatprep.subr.mxu0 0.0
    %378 = vmatpush2.msra.mxu0 0.0
    %379 = vmatprep.subr.mxu0 0.0
    %380 = vmatpush2.msra.mxu0 0.0
    %381 = vmatprep.subr.mxu0 0.0
    %382 = vmatpush2.msra.mxu0 0.0
    %383 = vmatprep.subr.mxu0 0.0
    %384 = vmatpush2.msra.mxu0 0.0
    %385 = vmatprep.subr.mxu0 0.0
    %386 = vmatpush2.msra.mxu0 0.0
    %387 = vmatprep.subr.mxu0 0.0
    %388 = vmatpush2.msra.mxu0 0.0
    %389 = vmatprep.subr.mxu0 0.0
    %390 = vmatpush2.msra.mxu0 0.0
    %391 = vmatprep.subr.mxu0 0.0
    %392 = vmatpush2.msra.mxu0 0.0
    %393 = vmatprep.subr.mxu0 0.0
    %394 = vmatpush2.msra.mxu0 0.0
    %395 = vmatprep.mubr.f32.mxu0 0.0
    %396 = vmatmul.mubr.f32.gmra.mxu0 %v320
    %v397 = vpop.f32.mrf.mxu0
    %v398 = vadd.f32 0.0, %v397
    %v399 = vpop.f32.mrf.mxu0
    %v400 = vadd.f32 0.0, %v399
    %401 = vmatprep.mubr.f32.mxu0 0.0
    %402 = vmatmul.mubr.f32.gmra.mxu0 %v323
    %v403 = vpop.f32.mrf.mxu0
    %v404 = vadd.f32 0.0, %v403
    %v405 = vpop.f32.mrf.mxu0
    %v406 = vadd.f32 0.0, %v405
    %407 = vmatprep.mubr.f32.mxu0 0.0
    %408 = vmatmul.mubr.f32.gmra.mxu0 %v326
    %v409 = vpop.f32.mrf.mxu0
    %v410 = vadd.f32 0.0, %v409
    %v411 = vpop.f32.mrf.mxu0
    %v412 = vadd.f32 0.0, %v411
    %413 = vmatprep.mubr.f32.mxu0 0.0
    %414 = vmatmul.mubr.f32.gmra.mxu0 %v329
    %v415 = vpop.f32.mrf.mxu0
    %v416 = vadd.f32 0.0, %v415
    %v417 = vpop.f32.mrf.mxu0
    %v418 = vadd.f32 0.0, %v417
    %419 = vdwg.mxu0
    %v420 = vadd.f32 %v265, %v398
    %v421 = vadd.f32 %v267, %v400
    %v422 = vadd.f32 %v271, %v404
    %v423 = vadd.f32 %v273, %v406
    %v424 = vadd.f32 %v277, %v410
    %v425 = vadd.f32 %v279, %v412
    %v426 = vadd.f32 %v283, %v416
    %v427 = vadd.f32 %v285, %v418
    %v428 = vmax.f32 %v292, %v420
    %v429 = vmax.f32 %v292, %v421
    %v430 = vmax.f32 %v292, %v422
    %v431 = vmax.f32 %v292, %v423
    %v432 = vmax.f32 %v292, %v424
    %v433 = vmax.f32 %v292, %v425
    %v434 = vmax.f32 %v292, %v426
    %v435 = vmax.f32 %v292, %v427
    %v436 = vmin.f32 %v301, %v428
    %v437 = vmin.f32 %v301, %v429
    %v438 = vmin.f32 %v301, %v430
    %v439 = vmin.f32 %v301, %v431
    %v440 = vmin.f32 %v301, %v432
    %v441 = vmin.f32 %v301, %v433
    %v442 = vmin.f32 %v301, %v434
    %v443 = vmin.f32 %v301, %v435
    %v444 = vsub.f32 %v420, %v436
    %v445 = vsub.f32 %v421, %v437
    %v446 = vsub.f32 %v422, %v438
    %v447 = vsub.f32 %v423, %v439
    %v448 = vsub.f32 %v424, %v440
    %v449 = vsub.f32 %v425, %v441
    %v450 = vsub.f32 %v426, %v442
    %v451 = vsub.f32 %v427, %v443
    %452 = vmatprep.subr.mxu0 0.0
    %453 = vmatpush1.msra.mxu0 0.0
    %454 = vmatprep.subr.mxu0 0.0
    %455 = vmatpush1.msra.mxu0 0.0
    %456 = vmatprep.subr.mxu0 0.0
    %457 = vmatpush1.msra.mxu0 0.0
    %458 = vmatprep.subr.mxu0 0.0
    %459 = vmatpush1.msra.mxu0 0.0
    %460 = vmatprep.subr.mxu0 0.0
    %461 = vmatpush1.msra.mxu0 0.0
    %462 = vmatprep.subr.mxu0 0.0
    %463 = vmatpush1.msra.mxu0 0.0
    %464 = vmatprep.subr.mxu0 0.0
    %465 = vmatpush1.msra.mxu0 0.0
    %466 = vmatprep.subr.mxu0 0.0
    %467 = vmatpush1.msra.mxu0 0.0
    %468 = vmatprep.subr.mxu0 0.0
    %469 = vmatpush1.msra.mxu0 0.0
    %470 = vmatprep.subr.mxu0 0.0
    %471 = vmatpush1.msra.mxu0 0.0
    %472 = vmatprep.subr.mxu0 0.0
    %473 = vmatpush1.msra.mxu0 0.0
    %474 = vmatprep.subr.mxu0 0.0
    %475 = vmatpush1.msra.mxu0 0.0
    %476 = vmatprep.subr.mxu0 %v451
    %477 = vmatpush1.msra.mxu0 %v450
    %478 = vmatprep.subr.mxu0 %v449
    %479 = vmatpush1.msra.mxu0 %v448
    %480 = vmatprep.subr.mxu0 %v447
    %481 = vmatpush1.msra.mxu0 %v446
    %482 = vmatprep.subr.mxu0 %v445
    %483 = vmatpush1.msra.mxu0 %v444
    %484 = vmatprep.subr.mxu0 0.0
    %485 = vmatpush2.msra.mxu0 0.0
    %486 = vmatprep.subr.mxu0 0.0
    %487 = vmatpush2.msra.mxu0 0.0
    %488 = vmatprep.subr.mxu0 0.0
    %489 = vmatpush2.msra.mxu0 0.0
    %490 = vmatprep.subr.mxu0 0.0
    %491 = vmatpush2.msra.mxu0 0.0
    %492 = vmatprep.subr.mxu0 0.0
    %493 = vmatpush2.msra.mxu0 0.0
    %494 = vmatprep.subr.mxu0 0.0
    %495 = vmatpush2.msra.mxu0 0.0
    %496 = vmatprep.subr.mxu0 0.0
    %497 = vmatpush2.msra.mxu0 0.0
    %498 = vmatprep.subr.mxu0 0.0
    %499 = vmatpush2.msra.mxu0 0.0
    %500 = vmatprep.subr.mxu0 0.0
    %501 = vmatpush2.msra.mxu0 0.0
    %502 = vmatprep.subr.mxu0 0.0
    %503 = vmatpush2.msra.mxu0 0.0
    %504 = vmatprep.subr.mxu0 0.0
    %505 = vmatpush2.msra.mxu0 0.0
    %506 = vmatprep.subr.mxu0 0.0
    %507 = vmatpush2.msra.mxu0 0.0
    %508 = vmatprep.subr.mxu0 0.0
    %509 = vmatpush2.msra.mxu0 0.0
    %510 = vmatprep.subr.mxu0 0.0
    %511 = vmatpush2.msra.mxu0 0.0
    %512 = vmatprep.subr.mxu0 0.0
    %513 = vmatpush2.msra.mxu0 0.0
    %514 = vmatprep.subr.mxu0 0.0
    %515 = vmatpush2.msra.mxu0 0.0
    %516 = vmatprep.mubr.f32.mxu0 0.0
    %517 = vmatmul.mubr.f32.gmra.mxu0 %v320
    %v518 = vpop.f32.mrf.mxu0
    %v519 = vadd.f32 0.0, %v518
    %v520 = vpop.f32.mrf.mxu0
    %v521 = vadd.f32 0.0, %v520
    %522 = vmatprep.mubr.f32.mxu0 0.0
    %523 = vmatmul.mubr.f32.gmra.mxu0 %v323
    %v524 = vpop.f32.mrf.mxu0
    %v525 = vadd.f32 0.0, %v524
    %v526 = vpop.f32.mrf.mxu0
    %v527 = vadd.f32 0.0, %v526
    %528 = vmatprep.mubr.f32.mxu0 0.0
    %529 = vmatmul.mubr.f32.gmra.mxu0 %v326
    %v530 = vpop.f32.mrf.mxu0
    %v531 = vadd.f32 0.0, %v530
    %v532 = vpop.f32.mrf.mxu0
    %v533 = vadd.f32 0.0, %v532
    %534 = vmatprep.mubr.f32.mxu0 0.0
    %535 = vmatmul.mubr.f32.gmra.mxu0 %v329
    %v536 = vpop.f32.mrf.mxu0
    %v537 = vadd.f32 0.0, %v536
    %v538 = vpop.f32.mrf.mxu0
    %v539 = vadd.f32 0.0, %v538
    %540 = vdwg.mxu0
    %v541 = vadd.f32 %v265, %v519
    %v542 = vadd.f32 %v267, %v521
    %v543 = vadd.f32 %v271, %v525
    %v544 = vadd.f32 %v273, %v527
    %v545 = vadd.f32 %v277, %v531
    %v546 = vadd.f32 %v279, %v533
    %v547 = vadd.f32 %v283, %v537
    %v548 = vadd.f32 %v285, %v539
    %v549 = vmax.f32 %v292, %v541
    %v550 = vmax.f32 %v292, %v542
    %v551 = vmax.f32 %v292, %v543
    %v552 = vmax.f32 %v292, %v544
    %v553 = vmax.f32 %v292, %v545
    %v554 = vmax.f32 %v292, %v546
    %v555 = vmax.f32 %v292, %v547
    %v556 = vmax.f32 %v292, %v548
    %v557 = vmin.f32 %v301, %v549
    %v558 = vmin.f32 %v301, %v550
    %v559 = vmin.f32 %v301, %v551
    %v560 = vmin.f32 %v301, %v552
    %v561 = vmin.f32 %v301, %v553
    %v562 = vmin.f32 %v301, %v554
    %v563 = vmin.f32 %v301, %v555
    %v564 = vmin.f32 %v301, %v556
    %v565 = vsub.f32 %v541, %v557
    %v566 = vsub.f32 %v542, %v558
    %v567 = vsub.f32 %v543, %v559
    %v568 = vsub.f32 %v544, %v560
    %v569 = vsub.f32 %v545, %v561
    %v570 = vsub.f32 %v546, %v562
    %v571 = vsub.f32 %v547, %v563
    %v572 = vsub.f32 %v548, %v564
    %573 = vmatprep.subr.mxu0 0.0
    %574 = vmatpush1.msra.mxu0 0.0
    %575 = vmatprep.subr.mxu0 0.0
    %576 = vmatpush1.msra.mxu0 0.0
    %577 = vmatprep.subr.mxu0 0.0
    %578 = vmatpush1.msra.mxu0 0.0
    %579 = vmatprep.subr.mxu0 0.0
    %580 = vmatpush1.msra.mxu0 0.0
    %581 = vmatprep.subr.mxu0 0.0
    %582 = vmatpush1.msra.mxu0 0.0
    %583 = vmatprep.subr.mxu0 0.0
    %584 = vmatpush1.msra.mxu0 0.0
    %585 = vmatprep.subr.mxu0 0.0
    %586 = vmatpush1.msra.mxu0 0.0
    %587 = vmatprep.subr.mxu0 0.0
    %588 = vmatpush1.msra.mxu0 0.0
    %589 = vmatprep.subr.mxu0 0.0
    %590 = vmatpush1.msra.mxu0 0.0
    %591 = vmatprep.subr.mxu0 0.0
    %592 = vmatpush1.msra.mxu0 0.0
    %593 = vmatprep.subr.mxu0 0.0
    %594 = vmatpush1.msra.mxu0 0.0
    %595 = vmatprep.subr.mxu0 0.0
    %596 = vmatpush1.msra.mxu0 0.0
    %597 = vmatprep.subr.mxu0 %v572
    %598 = vmatpush1.msra.mxu0 %v571
    %599 = vmatprep.subr.mxu0 %v570
    %600 = vmatpush1.msra.mxu0 %v569
    %601 = vmatprep.subr.mxu0 %v568
    %602 = vmatpush1.msra.mxu0 %v567
    %603 = vmatprep.subr.mxu0 %v566
    %604 = vmatpush1.msra.mxu0 %v565
    %605 = vmatprep.subr.mxu0 0.0
    %606 = vmatpush2.msra.mxu0 0.0
    %607 = vmatprep.subr.mxu0 0.0
    %608 = vmatpush2.msra.mxu0 0.0
    %609 = vmatprep.subr.mxu0 0.0
    %610 = vmatpush2.msra.mxu0 0.0
    %611 = vmatprep.subr.mxu0 0.0
    %612 = vmatpush2.msra.mxu0 0.0
    %613 = vmatprep.subr.mxu0 0.0
    %614 = vmatpush2.msra.mxu0 0.0
    %615 = vmatprep.subr.mxu0 0.0
    %616 = vmatpush2.msra.mxu0 0.0
    %617 = vmatprep.subr.mxu0 0.0
    %618 = vmatpush2.msra.mxu0 0.0
    %619 = vmatprep.subr.mxu0 0.0
    %620 = vmatpush2.msra.mxu0 0.0
    %621 = vmatprep.subr.mxu0 0.0
    %622 = vmatpush2.msra.mxu0 0.0
    %623 = vmatprep.subr.mxu0 0.0
    %624 = vmatpush2.msra.mxu0 0.0
    %625 = vmatprep.subr.mxu0 0.0
    %626 = vmatpush2.msra.mxu0 0.0
    %627 = vmatprep.subr.mxu0 0.0
    %628 = vmatpush2.msra.mxu0 0.0
    %629 = vmatprep.subr.mxu0 0.0
    %630 = vmatpush2.msra.mxu0 0.0
    %631 = vmatprep.subr.mxu0 0.0
    %632 = vmatpush2.msra.mxu0 0.0
    %633 = vmatprep.subr.mxu0 0.0
    %634 = vmatpush2.msra.mxu0 0.0
    %635 = vmatprep.subr.mxu0 0.0
    %636 = vmatpush2.msra.mxu0 0.0
    %637 = vmatprep.mubr.f32.mxu0 0.0
    %638 = vmatmul.mubr.f32.gmra.mxu0 %v320
    %v639 = vpop.f32.mrf.mxu0
    %v640 = vadd.f32 0.0, %v639
    %v641 = vpop.f32.mrf.mxu0
    %v642 = vadd.f32 0.0, %v641
    %643 = vmatprep.mubr.f32.mxu0 0.0
    %644 = vmatmul.mubr.f32.gmra.mxu0 %v323
    %v645 = vpop.f32.mrf.mxu0
    %v646 = vadd.f32 0.0, %v645
    %v647 = vpop.f32.mrf.mxu0
    %v648 = vadd.f32 0.0, %v647
    %649 = vmatprep.mubr.f32.mxu0 0.0
    %650 = vmatmul.mubr.f32.gmra.mxu0 %v326
    %v651 = vpop.f32.mrf.mxu0
    %v652 = vadd.f32 0.0, %v651
    %v653 = vpop.f32.mrf.mxu0
    %v654 = vadd.f32 0.0, %v653
    %655 = vmatprep.mubr.f32.mxu0 0.0
    %656 = vmatmul.mubr.f32.gmra.mxu0 %v329
    %v657 = vpop.f32.mrf.mxu0
    %v658 = vadd.f32 0.0, %v657
    %v659 = vpop.f32.mrf.mxu0
    %v660 = vadd.f32 0.0, %v659
    %661 = vdwg.mxu0
    %v662 = vadd.f32 %v265, %v640
    %v663 = vadd.f32 %v267, %v642
    %v664 = vadd.f32 %v271, %v646
    %v665 = vadd.f32 %v273, %v648
    %v666 = vadd.f32 %v277, %v652
    %v667 = vadd.f32 %v279, %v654
    %v668 = vadd.f32 %v283, %v658
    %v669 = vadd.f32 %v285, %v660
    %v670 = vmax.f32 %v292, %v662
    %v671 = vmax.f32 %v292, %v663
    %v672 = vmax.f32 %v292, %v664
    %v673 = vmax.f32 %v292, %v665
    %v674 = vmax.f32 %v292, %v666
    %v675 = vmax.f32 %v292, %v667
    %v676 = vmax.f32 %v292, %v668
    %v677 = vmax.f32 %v292, %v669
    %v678 = vmin.f32 %v301, %v670
    %v679 = vmin.f32 %v301, %v671
    %v680 = vmin.f32 %v301, %v672
    %v681 = vmin.f32 %v301, %v673
    %v682 = vmin.f32 %v301, %v674
    %v683 = vmin.f32 %v301, %v675
    %v684 = vmin.f32 %v301, %v676
    %v685 = vmin.f32 %v301, %v677
    %v686 = vsub.f32 %v662, %v678
    %v687 = vsub.f32 %v663, %v679
    %v688 = vsub.f32 %v664, %v680
    %v689 = vsub.f32 %v665, %v681
    %v690 = vsub.f32 %v666, %v682
    %v691 = vsub.f32 %v667, %v683
    %v692 = vsub.f32 %v668, %v684
    %v693 = vsub.f32 %v669, %v685
    %v694 = vld [vmem:[%s5] sm:$0xff]
    %v695 = vld [vmem:[%s5 + $0x8] sm:$0xff]
    %v696 = vld [vmem:[%s6] sm:$0xff]
    %v697 = vld [vmem:[%s6 + $0x8] sm:$0xff]
    %699 = vset.pattern.permute.xlu0 0
    %700 = vperm.xlu0 %699, %v696
    %v701 = vpop.permute.xlu0 %700
    %704 = vset.pattern.permute.xlu0 0
    %705 = vperm.xlu0 %704, %v697
    %v706 = vpop.permute.xlu0 %705
    %v709 = vsel %vm318, %v694, 0
    %v712 = vsel %vm318, %v695, 0
    %714 = vmatprep.subr.mxu0 0.0
    %715 = vmatpush1.msra.mxu0 0.0
    %716 = vmatprep.subr.mxu0 0.0
    %717 = vmatpush1.msra.mxu0 0.0
    %718 = vmatprep.subr.mxu0 0.0
    %719 = vmatpush1.msra.mxu0 0.0
    %720 = vmatprep.subr.mxu0 0.0
    %721 = vmatpush1.msra.mxu0 0.0
    %722 = vmatprep.subr.mxu0 0.0
    %723 = vmatpush1.msra.mxu0 0.0
    %724 = vmatprep.subr.mxu0 0.0
    %725 = vmatpush1.msra.mxu0 0.0
    %726 = vmatprep.subr.mxu0 0.0
    %727 = vmatpush1.msra.mxu0 0.0
    %728 = vmatprep.subr.mxu0 0.0
    %729 = vmatpush1.msra.mxu0 0.0
    %730 = vmatprep.subr.mxu0 0.0
    %731 = vmatpush1.msra.mxu0 0.0
    %732 = vmatprep.subr.mxu0 0.0
    %733 = vmatpush1.msra.mxu0 0.0
    %734 = vmatprep.subr.mxu0 0.0
    %735 = vmatpush1.msra.mxu0 0.0
    %736 = vmatprep.subr.mxu0 0.0
    %737 = vmatpush1.msra.mxu0 0.0
    %738 = vmatprep.subr.mxu0 %v693
    %739 = vmatpush1.msra.mxu0 %v692
    %740 = vmatprep.subr.mxu0 %v691
    %741 = vmatpush1.msra.mxu0 %v690
    %742 = vmatprep.subr.mxu0 %v689
    %743 = vmatpush1.msra.mxu0 %v688
    %744 = vmatprep.subr.mxu0 %v687
    %745 = vmatpush1.msra.mxu0 %v686
    %746 = vmatprep.subr.mxu0 0.0
    %747 = vmatpush2.msra.mxu0 0.0
    %748 = vmatprep.subr.mxu0 0.0
    %749 = vmatpush2.msra.mxu0 0.0
    %750 = vmatprep.subr.mxu0 0.0
    %751 = vmatpush2.msra.mxu0 0.0
    %752 = vmatprep.subr.mxu0 0.0
    %753 = vmatpush2.msra.mxu0 0.0
    %754 = vmatprep.subr.mxu0 0.0
    %755 = vmatpush2.msra.mxu0 0.0
    %756 = vmatprep.subr.mxu0 0.0
    %757 = vmatpush2.msra.mxu0 0.0
    %758 = vmatprep.subr.mxu0 0.0
    %759 = vmatpush2.msra.mxu0 0.0
    %760 = vmatprep.subr.mxu0 0.0
    %761 = vmatpush2.msra.mxu0 0.0
    %762 = vmatprep.subr.mxu0 0.0
    %763 = vmatpush2.msra.mxu0 0.0
    %764 = vmatprep.subr.mxu0 0.0
    %765 = vmatpush2.msra.mxu0 0.0
    %766 = vmatprep.subr.mxu0 0.0
    %767 = vmatpush2.msra.mxu0 0.0
    %768 = vmatprep.subr.mxu0 0.0
    %769 = vmatpush2.msra.mxu0 0.0
    %770 = vmatprep.subr.mxu0 0.0
    %771 = vmatpush2.msra.mxu0 0.0
    %772 = vmatprep.subr.mxu0 0.0
    %773 = vmatpush2.msra.mxu0 0.0
    %774 = vmatprep.subr.mxu0 0.0
    %775 = vmatpush2.msra.mxu0 0.0
    %776 = vmatprep.subr.mxu0 0.0
    %777 = vmatpush2.msra.mxu0 0.0
    %778 = vmatprep.mubr.f32.mxu0 0.0
    %779 = vmatmul.mubr.f32.gmra.mxu0 %v709
    %v780 = vpop.f32.mrf.mxu0
    %v781 = vadd.f32 %v701, %v780
    %v782 = vpop.f32.mrf.mxu0
    %v783 = vadd.f32 %v701, %v782
    %784 = vmatprep.mubr.f32.mxu0 0.0
    %785 = vmatmul.mubr.f32.gmra.mxu0 %v712
    %v786 = vpop.f32.mrf.mxu0
    %v787 = vadd.f32 %v706, %v786
    %v788 = vpop.f32.mrf.mxu0
    %v789 = vadd.f32 %v706, %v788
    %790 = vdwg.mxu0
    %791 = vst [vmem:[#allocation3] sm:$0xff] %v781
    %792 = vst [vmem:[#allocation3 + $0x8] sm:$0xff] %v783
    %793 = vst [vmem:[#allocation3 + $0x10] sm:$0xff] %v787
    %794 = vst [vmem:[#allocation3 + $0x18] sm:$0xff] %v789
    // Predicated region
    $region30: #{tpu_custom_call.1} parent=1 // pred_check
      _
    $region31: #{tpu_custom_call.1} parent=1 // pred_check_branch
      %796 = sbr.rel (0) target = $region33
    $region32: #{tpu_custom_call.1} parent=1 // pred_region
      %s798 = ssub.s32 512, 512
      %799 = vsyncadd [#allocation4], %s798
      %s800 = sshll.u32 [#allocation3], 4
      %s801 = int_to_ptr.vmem [resolvable:$true] %s800
      %806 = dma.vmem_to_hbm [thread:$0]  %s801, 512, %s7, [#allocation4], 256, 256, 16
    $region33: #{tpu_custom_call.1} parent=1 // pred_fallthru
      _
    // Predicated region
    $region34: #{tpu_custom_call.1} parent=1 // pred_check
      _
    $region35: #{tpu_custom_call.1} parent=1 // pred_check_branch
      %808 = sbr.rel (0) target = $region37
    $region36: #{tpu_custom_call.1} parent=1 // pred_region
      %809 = dma.done [#allocation4], 512
    $region37: #{tpu_custom_call.1} parent=1 // pred_fallthru
      _
    %810 = vsyncpa [#allocation4], 1

</llo_original>
